<compile_context>
chip_gen: v5e
topology: v5e:2x2
jax: 0.10.0
libtpu: 0.0.40
codegen_flags: <defaults>
</compile_context>

<pallas_src>
import functools
import math

import jax
import jax.numpy as jnp
from jax.experimental import pallas as pl
from jax.experimental.pallas import tpu as pltpu


def _round_up(x, m):
    return ((x + m - 1) // m) * m


def _cdiv(a, b):
    return (a + b - 1) // b


def _critic_kernel(state_ref, action_ref, w1_ref, b1_ref, w2_ref, b2_ref,
                   w4_ref, b4_ref, o_ref):
    mxu_dtype = w1_ref.dtype                  # f32, or bf16 (MXU-native on all gens)

    # torch.cat([state, action], -1) done in-kernel: both operands sit inside
    # one vreg's 128 lanes, so this is a cheap lane-level concat and fc1 is a
    # single MXU pass over K = state_dim + action_dim.
    x = jnp.concatenate([state_ref[...], action_ref[...]], axis=-1)

    # fc1
    h = jnp.dot(x.astype(mxu_dtype), w1_ref[...],
                preferred_element_type=jnp.float32)
    h = jnp.maximum(h + b1_ref[...], 0.0)     # bias + ReLU in f32 (VPU)

    # fc2
    h = jnp.dot(h.astype(mxu_dtype), w2_ref[...],
                preferred_element_type=jnp.float32)
    h = jnp.maximum(h + b2_ref[...], 0.0)

    # fc4 (N=1): VPU multiply + XLU lane reduction; no 1-lane MXU pass.
    q = jnp.sum(h * w4_ref[...], axis=-1, keepdims=True)   # (tile_b, 1) f32
    o_ref[...] = q + b4_ref[0]                              # scalar bias from SMEM


def _choose_tile(batch, block_batch, in_dim, hidden):
    """Batch-tile selection.

    * Big tiles amortize per-grid-step overhead.
    * Capped so the tile-dependent f32 footprint (double-buffered in/out blocks
      plus the in-kernel x / hidden activations) stays under ~10 MiB, inside
      v5e's 16 MiB default scoped-VMEM limit (v6e/v7x defaults are larger).
    * Multiple of 8 sublanes whenever the tile is not the full batch extent.
    * For large batches, split into an even number of >=2 tiles so v7x's two
      TensorCores both get work on the "parallel" grid axis.
    """
    bytes_per_row = 4 * (3 * (in_dim + 1) + 2 * hidden)
    vmem_cap = max(8, ((10 * 1024 * 1024) // bytes_per_row) // 8 * 8)
    block_batch = max(8, min(_round_up(block_batch, 8), vmem_cap))

    num_tiles = _cdiv(batch, block_batch)
    if batch >= 1024 and num_tiles < 2:
        num_tiles = 2                     # feed both v7x TensorCores
    if num_tiles > 1 and num_tiles % 2:
        num_tiles += 1                    # keep the parallel grid even
    if num_tiles == 1:
        return batch                      # full-extent block: no pad, no mask
    return _round_up(_cdiv(batch, num_tiles), 8)


@functools.partial(jax.jit, static_argnames=("block_batch",))
def critic_forward(state, action, params, *, block_batch=2048):
    """state: (B, state_dim) f32, action: (B, action_dim) f32 -> (B, 1) f32."""
    B, state_dim = state.shape
    action_dim = action.shape[-1]
    in_dim = state_dim + action_dim
    hidden = params["w2"].shape[-1]

    tile_b = _choose_tile(B, block_batch, in_dim, hidden)
    grid = (_cdiv(B, tile_b),)   # no host-side pad: Pallas masks the edge block

    # Weights/biases: full-array blocks with constant index_maps -> fetched
    # once and kept resident in VMEM across the (parallel) batch grid.
    def resident(arr):
        return pl.BlockSpec(arr.shape, lambda i: (0, 0))

    in_specs = [
        pl.BlockSpec((tile_b, state_dim), lambda i: (i, 0)),
        pl.BlockSpec((tile_b, action_dim), lambda i: (i, 0)),
        resident(params["w1"]),
        resident(params["b1"]),
        resident(params["w2"]),
        resident(params["b2"]),
        resident(params["w4_row"]),
        pl.BlockSpec(memory_space=pltpu.SMEM),   # b4: single scalar in SMEM
    ]
    out_specs = pl.BlockSpec((tile_b, 1), lambda i: (i, 0))

    flops = 2 * B * (in_dim * hidden + hidden * hidden + hidden)
    bytes_accessed = (
        state.size * state.dtype.itemsize
        + action.size * action.dtype.itemsize
        + sum(int(v.size) * v.dtype.itemsize for v in params.values())
        + B * 4)

    return pl.pallas_call(
        _critic_kernel,
        out_shape=jax.ShapeDtypeStruct((B, 1), jnp.float32),
        grid=grid,
        in_specs=in_specs,
        out_specs=out_specs,
        compiler_params=pltpu.CompilerParams(
            dimension_semantics=("parallel",)),
        cost_estimate=pl.CostEstimate(
            flops=flops, transcendentals=0, bytes_accessed=bytes_accessed),
    )(state, action,
      params["w1"], params["b1"], params["w2"], params["b2"],
      params["w4_row"], params["b4"])


def init_critic_params(key, state_dim, action_dim, hidden_size,
                       matmul_dtype=jnp.float32):
    """torch.nn.Linear default init: U[-1/sqrt(fan_in), +1/sqrt(fan_in)].

    Kernel-friendly layout:
      * fc1/fc2 weights stored (in, out) so y = x @ W; fc1's weight is the full
        stacked (state_dim + action_dim, H) matrix (the concat happens in-kernel).
      * fc4 weight stored as a (1, H) row for the VPU reduce; its bias b4 is a
        single f32 scalar kept in SMEM.
      * matmul_dtype=bf16 halves weight HBM/VMEM traffic; the MXU is bf16-native
        on v5e, v6e and v7x. Accumulation stays f32, and biases/ReLU/fc4 stay
        f32 on the VPU (v5e has no bf16 VPU path). Results then differ from the
        f32 PyTorch reference beyond tight tolerances (inputs/activations are
        cast to bf16 before each MXU pass).
    fc3 / fc5 exist in the PyTorch __init__ but are unused in forward; omitted.
    """
    def uniform(k, shape, fan_in):
        bound = 1.0 / math.sqrt(fan_in)
        return jax.random.uniform(k, shape, jnp.float32, -bound, bound)

    k1w, k1b, k2w, k2b, k4w, k4b = jax.random.split(key, 6)
    in_dim = state_dim + action_dim
    return {
        "w1": uniform(k1w, (in_dim, hidden_size), in_dim).astype(matmul_dtype),
        "b1": uniform(k1b, (1, hidden_size), in_dim),
        "w2": uniform(k2w, (hidden_size, hidden_size), hidden_size).astype(matmul_dtype),
        "b2": uniform(k2b, (1, hidden_size), hidden_size),
        "w4_row": uniform(k4w, (1, hidden_size), hidden_size),
        "b4": uniform(k4b, (1,), hidden_size),
    }


def critic_reference(state, action, params):
    """Pure-JAX reference of the same math as the PyTorch forward."""
    x = jnp.concatenate([state, action], axis=-1)
    h = jnp.maximum(x @ params["w1"].astype(jnp.float32) + params["b1"], 0.0)
    h = jnp.maximum(h @ params["w2"].astype(jnp.float32) + params["b2"], 0.0)
    return jnp.sum(h * params["w4_row"], axis=-1, keepdims=True) + params["b4"]


if __name__ == "__main__":
    state_dim, action_dim, hidden_size = 12, 4, 32
    key = jax.random.PRNGKey(0)
    kp, ks, ka = jax.random.split(key, 3)

    params = init_critic_params(kp, state_dim, action_dim, hidden_size)

    # --- small batch: single full-extent tile ---------------------------------
    B = 8
    state = jax.random.normal(ks, (B, state_dim), jnp.float32)
    action = jax.random.normal(ka, (B, action_dim), jnp.float32)

    q = critic_forward(state, action, params)
    jax.block_until_ready(q)
    ref = critic_reference(state, action, params)
    assert q.shape == (B, 1)
    assert jnp.allclose(q, ref, atol=1e-3, rtol=1e-3), \
        float(jnp.max(jnp.abs(q - ref)))

    # --- non-multiple-of-8 batch, default tile: single tile, no pad, no mask ---
    B2 = 300
    state2 = jax.random.normal(jax.random.fold_in(ks, 1), (B2, state_dim), jnp.float32)
    action2 = jax.random.normal(jax.random.fold_in(ka, 1), (B2, action_dim), jnp.float32)
    q2 = critic_forward(state2, action2, params)
    jax.block_until_ready(q2)
    ref2 = critic_reference(state2, action2, params)
    assert q2.shape == (B2, 1)
    assert jnp.allclose(q2, ref2, atol=1e-3, rtol=1e-3), \
        float(jnp.max(jnp.abs(q2 - ref2)))

    # --- awkward block_batch (not a multiple of 8): multi-tile + masked edge ---
    q2b = critic_forward(state2, action2, params, block_batch=100)
    jax.block_until_ready(q2b)
    assert jnp.allclose(q2b, ref2, atol=1e-3, rtol=1e-3), \
        float(jnp.max(jnp.abs(q2b - ref2)))

    # --- large batch: even parallel grid (both v7x TCs) + masked edge block ----
    B3 = 2500
    state3 = jax.random.normal(jax.random.fold_in(ks, 2), (B3, state_dim), jnp.float32)
    action3 = jax.random.normal(jax.random.fold_in(ka, 2), (B3, action_dim), jnp.float32)
    q3 = critic_forward(state3, action3, params, block_batch=1024)
    jax.block_until_ready(q3)
    ref3 = critic_reference(state3, action3, params)
    assert q3.shape == (B3, 1)
    assert jnp.allclose(q3, ref3, atol=1e-3, rtol=1e-3), \
        float(jnp.max(jnp.abs(q3 - ref3)))

    # --- bf16 MXU operands (MXU-native on v5e/v6e/v7x): f32 acc, loose tol -----
    params_bf16 = init_critic_params(kp, state_dim, action_dim, hidden_size,
                                     matmul_dtype=jnp.bfloat16)
    q4 = critic_forward(state, action, params_bf16)
    jax.block_until_ready(q4)
    assert jnp.allclose(q4, ref, atol=1e-1, rtol=1e-1), \
        float(jnp.max(jnp.abs(q4 - ref)))

    print("KERNEL_OK")
</pallas_src>

<mosaic_0001>
module attributes {stable_mosaic.version = 11 : i64} {
  func.func @_critic_kernel(%arg0: i32, %arg1: memref<8x12xf32, #tpu.memory_space<vmem>>, %arg2: memref<8x4xf32, #tpu.memory_space<vmem>>, %arg3: memref<16x32xf32, #tpu.memory_space<vmem>>, %arg4: memref<1x32xf32, #tpu.memory_space<vmem>>, %arg5: memref<32x32xf32, #tpu.memory_space<vmem>>, %arg6: memref<1x32xf32, #tpu.memory_space<vmem>>, %arg7: memref<1x32xf32, #tpu.memory_space<vmem>>, %arg8: memref<1xf32, #tpu.memory_space<smem>>, %arg9: memref<8x1xf32, #tpu.memory_space<vmem>>) attributes {dimension_semantics = [#tpu.dimension_semantics<parallel>], iteration_bounds = array<i64: 1>, scalar_prefetch = 0 : i64, scratch_operands = 0 : i64, tpu.core_type = #tpu.core_type<tc>, window_params = [{transform_indices = @transform_0, window_bounds = array<i64: 8, 12>}, {transform_indices = @transform_1, window_bounds = array<i64: 8, 4>}, {pipeline_mode = #tpu.pipeline_mode<synchronous>, transform_indices = @transform_2, window_bounds = array<i64: 16, 32>}, {pipeline_mode = #tpu.pipeline_mode<synchronous>, transform_indices = @transform_3, window_bounds = array<i64: 1, 32>}, {pipeline_mode = #tpu.pipeline_mode<synchronous>, transform_indices = @transform_4, window_bounds = array<i64: 32, 32>}, {pipeline_mode = #tpu.pipeline_mode<synchronous>, transform_indices = @transform_5, window_bounds = array<i64: 1, 32>}, {pipeline_mode = #tpu.pipeline_mode<synchronous>, transform_indices = @transform_6, window_bounds = array<i64: 1, 32>}, {transform_indices = @transform_7, window_bounds = array<i64: 1>}, {transform_indices = @transform_8, window_bounds = array<i64: 8, 1>}]} {
    %c0 = arith.constant 0 : index
    %c0_0 = arith.constant 0 : index
    %0 = vector.load %arg1[%c0, %c0_0] : memref<8x12xf32, #tpu.memory_space<vmem>>, vector<8x12xf32>
    %c0_1 = arith.constant 0 : index
    %c0_2 = arith.constant 0 : index
    %1 = vector.load %arg2[%c0_1, %c0_2] : memref<8x4xf32, #tpu.memory_space<vmem>>, vector<8x4xf32>
    %2 = tpu.concatenate %0, %1 in 1 : vector<8x12xf32>, vector<8x4xf32> -> vector<8x16xf32>
    %c0_3 = arith.constant 0 : index
    %c0_4 = arith.constant 0 : index
    %3 = vector.load %arg3[%c0_3, %c0_4] : memref<16x32xf32, #tpu.memory_space<vmem>>, vector<16x32xf32>
    %cst = arith.constant dense<0.000000e+00> : vector<8x32xf32>
    %4 = tpu.matmul %2, %3, %cst {dimension_numbers = #tpu.dot_dimension_numbers<[1], [0], [0], [1], [0, 0, 1, 1], [], []>} : vector<8x16xf32>, vector<16x32xf32>, vector<8x32xf32> -> vector<8x32xf32>
    %c0_5 = arith.constant 0 : index
    %c0_6 = arith.constant 0 : index
    %5 = vector.load %arg4[%c0_5, %c0_6] : memref<1x32xf32, #tpu.memory_space<vmem>>, vector<1x32xf32>
    %6 = vector.broadcast %5 : vector<1x32xf32> to vector<8x32xf32>
    %7 = arith.addf %4, %6 : vector<8x32xf32>
    %cst_7 = arith.constant 0.000000e+00 : f32
    %8 = vector.broadcast %cst_7 : f32 to vector<8x32xf32>
    %9 = arith.maximumf %7, %8 : vector<8x32xf32>
    %c0_8 = arith.constant 0 : index
    %c0_9 = arith.constant 0 : index
    %10 = vector.load %arg5[%c0_8, %c0_9] : memref<32x32xf32, #tpu.memory_space<vmem>>, vector<32x32xf32>
    %cst_10 = arith.constant dense<0.000000e+00> : vector<8x32xf32>
    %11 = tpu.matmul %9, %10, %cst_10 {dimension_numbers = #tpu.dot_dimension_numbers<[1], [0], [0], [1], [0, 0, 1, 1], [], []>} : vector<8x32xf32>, vector<32x32xf32>, vector<8x32xf32> -> vector<8x32xf32>
    %c0_11 = arith.constant 0 : index
    %c0_12 = arith.constant 0 : index
    %12 = vector.load %arg6[%c0_11, %c0_12] : memref<1x32xf32, #tpu.memory_space<vmem>>, vector<1x32xf32>
    %13 = vector.broadcast %12 : vector<1x32xf32> to vector<8x32xf32>
    %14 = arith.addf %11, %13 : vector<8x32xf32>
    %cst_13 = arith.constant 0.000000e+00 : f32
    %15 = vector.broadcast %cst_13 : f32 to vector<8x32xf32>
    %16 = arith.maximumf %14, %15 : vector<8x32xf32>
    %c0_14 = arith.constant 0 : index
    %c0_15 = arith.constant 0 : index
    %17 = vector.load %arg7[%c0_14, %c0_15] : memref<1x32xf32, #tpu.memory_space<vmem>>, vector<1x32xf32>
    %18 = vector.broadcast %17 : vector<1x32xf32> to vector<8x32xf32>
    %19 = arith.mulf %16, %18 : vector<8x32xf32>
    %cst_16 = arith.constant dense<0.000000e+00> : vector<8xf32>
    %20 = vector.multi_reduction <add>, %19, %cst_16 [1] : vector<8x32xf32> to vector<8xf32>
    %21 = vector.shape_cast %20 : vector<8xf32> to vector<8x1xf32>
    %c0_17 = arith.constant 0 : index
    %22 = memref.load %arg8[%c0_17] : memref<1xf32, #tpu.memory_space<smem>>
    %23 = vector.broadcast %22 : f32 to vector<8x1xf32>
    %24 = arith.addf %21, %23 : vector<8x1xf32>
    %c0_18 = arith.constant 0 : index
    %c0_19 = arith.constant 0 : index
    %25 = vector.load %arg9[%c0_18, %c0_19] : memref<8x1xf32, #tpu.memory_space<vmem>>, vector<8x1xf32>
    tpu.vector_store %arg9[%c0_18, %c0_19], %24 {strides = array<i32>} : memref<8x1xf32, #tpu.memory_space<vmem>>, vector<8x1xf32>,
    return
  }
  func.func @transform_0(%arg0: i32) -> (i32, i32) {
    %c0_i32 = arith.constant 0 : i32
    %c0_i32_0 = arith.constant 0 : i32
    return %arg0, %c0_i32 : i32, i32
  }
  func.func @transform_1(%arg0: i32) -> (i32, i32) {
    %c0_i32 = arith.constant 0 : i32
    %c0_i32_0 = arith.constant 0 : i32
    return %arg0, %c0_i32 : i32, i32
  }
  func.func @transform_2(%arg0: i32) -> (i32, i32) {
    %c0_i32 = arith.constant 0 : i32
    %c0_i32_0 = arith.constant 0 : i32
    %c0_i32_1 = arith.constant 0 : i32
    return %c0_i32, %c0_i32_0 : i32, i32
  }
  func.func @transform_3(%arg0: i32) -> (i32, i32) {
    %c0_i32 = arith.constant 0 : i32
    %c0_i32_0 = arith.constant 0 : i32
    %c0_i32_1 = arith.constant 0 : i32
    return %c0_i32, %c0_i32_0 : i32, i32
  }
  func.func @transform_4(%arg0: i32) -> (i32, i32) {
    %c0_i32 = arith.constant 0 : i32
    %c0_i32_0 = arith.constant 0 : i32
    %c0_i32_1 = arith.constant 0 : i32
    return %c0_i32, %c0_i32_0 : i32, i32
  }
  func.func @transform_5(%arg0: i32) -> (i32, i32) {
    %c0_i32 = arith.constant 0 : i32
    %c0_i32_0 = arith.constant 0 : i32
    %c0_i32_1 = arith.constant 0 : i32
    return %c0_i32, %c0_i32_0 : i32, i32
  }
  func.func @transform_6(%arg0: i32) -> (i32, i32) {
    %c0_i32 = arith.constant 0 : i32
    %c0_i32_0 = arith.constant 0 : i32
    %c0_i32_1 = arith.constant 0 : i32
    return %c0_i32, %c0_i32_0 : i32, i32
  }
  func.func @transform_7(%arg0: i32) -> i32 {
    %c0_i32 = arith.constant 0 : i32
    %c0_i32_0 = arith.constant 0 : i32
    return %c0_i32 : i32
  }
  func.func @transform_8(%arg0: i32) -> (i32, i32) {
    %c0_i32 = arith.constant 0 : i32
    %c0_i32_0 = arith.constant 0 : i32
    return %arg0, %c0_i32 : i32, i32
  }
}

</mosaic_0001>

<llo_original>
// kernel: critic_forward.1
$region0: #{critic_forward.1}
  #allocation0 [shape = 'u32[]', space=smem, size = 0x4, offset = 0x4, fixed_abs, tag = 'smem constant byte address 0x4 - core index']
  #allocation1 [shape = 'u32[72,128]{1,0:T(1,128)}', space=vmem, size = 0x9000, scoped, tag = 'internal scratch']
  #allocation2 [shape = 'f32[1]{0:T(128)S(6)}', space=smem, size = 0x200, scoped, tag = 'scoped memory for critic_forward.1']
  %s0 = inlined_call_operand.hbm [shape: f32[8,12], index: 0, kind: input, shape index: {}]
  %s1 = inlined_call_operand.vmem [shape: f32[8,4], index: 1, kind: input, shape index: {}]
  %s2 = inlined_call_operand.vmem [shape: f32[16,32], index: 2, kind: input, shape index: {}]
  %s3 = inlined_call_operand.vmem [shape: f32[1,32], index: 3, kind: input, shape index: {}]
  %s4 = inlined_call_operand.hbm [shape: f32[32,32], index: 4, kind: input, shape index: {}]
  %s5 = inlined_call_operand.hbm [shape: f32[1,32], index: 5, kind: input, shape index: {}]
  %s6 = inlined_call_operand.vmem [shape: f32[1,32], index: 6, kind: input, shape index: {}]
  %s7 = inlined_call_operand.<no memory space> [shape: f32[1], index: 7, kind: input, shape index: {}]
  %s8 = inlined_call_operand.vmem [shape: f32[8,1], index: 8, kind: output, shape index: {}]
  %s9 = sld [smem:[#allocation0]]
  $region54: #{critic_forward.1} parent=0
    _
  %s11 = ssub.s32 1, %s9
  %s12 = scalar_select 0, %s11, %s9
  %13 = sst [smem:[#allocation2]] %s7
  $region1: #{critic_forward.1} parent=0
    #allocation3 [shape = 'u8[4096]{0}', space=vmem, size = 0x1000, scoped, tag = 'input window, operand 0, single buffered']
    #allocation4 [shape = 's32[1]{0}', space=sflag, size = 0x4, scoped, tag = 'scoped memory for critic_forward.1']
    #allocation5 [shape = 'u8[16384]{0}', space=vmem, size = 0x4000, scoped, tag = 'input window, operand 4, single buffered']
    #allocation6 [shape = 's32[1]{0}', space=sflag, size = 0x4, scoped, tag = 'scoped memory for critic_forward.1']
    #allocation7 [shape = 'u8[512]{0}', space=vmem, size = 0x400, scoped, tag = 'input window, operand 5, single buffered']
    %14 = vsyncpa [#allocation4], 0
    %15 = vsyncpa [#allocation6], 0
    // Predicated region
    $region2: #{critic_forward.1} parent=1 // pred_check
      _
    $region3: #{critic_forward.1} parent=1 // pred_check_branch
      %17 = sbr.rel (0) target = $region5
    $region4: #{critic_forward.1} parent=1 // pred_region
      %19 = vsyncadd [#allocation4], 0
      %s21 = sshll.u32 %s0, 4
      %s22 = int_to_ptr.hbm [resolvable:$true] %s21
      %s23 = sshll.u32 [#allocation3], 4
      %s24 = int_to_ptr.vmem [resolvable:$true] %s23
      %26 = dma.hbm_to_vmem [thread:$0]  %s22, 128, %s24, [#allocation4]
    $region5: #{critic_forward.1} parent=1 // pred_fallthru
      _
    // Predicated region
    $region6: #{critic_forward.1} parent=1 // pred_check
      _
    $region7: #{critic_forward.1} parent=1 // pred_check_branch
      %28 = sbr.rel (0) target = $region9
    $region8: #{critic_forward.1} parent=1 // pred_region
      _
    $region9: #{critic_forward.1} parent=1 // pred_fallthru
      _
    // Predicated region
    $region10: #{critic_forward.1} parent=1 // pred_check
      _
    $region11: #{critic_forward.1} parent=1 // pred_check_branch
      %30 = sbr.rel (0) target = $region13
    $region12: #{critic_forward.1} parent=1 // pred_region
      _
    $region13: #{critic_forward.1} parent=1 // pred_fallthru
      _
    // Predicated region
    $region14: #{critic_forward.1} parent=1 // pred_check
      _
    $region15: #{critic_forward.1} parent=1 // pred_check_branch
      %32 = sbr.rel (0) target = $region17
    $region16: #{critic_forward.1} parent=1 // pred_region
      _
    $region17: #{critic_forward.1} parent=1 // pred_fallthru
      _
    // Predicated region
    $region18: #{critic_forward.1} parent=1 // pred_check
      _
    $region19: #{critic_forward.1} parent=1 // pred_check_branch
      %34 = sbr.rel (0) target = $region21
    $region20: #{critic_forward.1} parent=1 // pred_region
      %36 = vsyncadd [#allocation6], 0
      %s37 = sshll.u32 %s4, 4
      %s38 = int_to_ptr.hbm [resolvable:$true] %s37
      %s39 = sshll.u32 [#allocation5], 4
      %s40 = int_to_ptr.vmem [resolvable:$true] %s39
      %45 = dma.hbm_to_vmem [thread:$0]  %s38, 512, %s40, [#allocation6], 128, 128, 8
    $region21: #{critic_forward.1} parent=1 // pred_fallthru
      _
    // Predicated region
    $region22: #{critic_forward.1} parent=1 // pred_check
      _
    $region23: #{critic_forward.1} parent=1 // pred_check_branch
      %47 = sbr.rel (0) target = $region25
    $region24: #{critic_forward.1} parent=1 // pred_region
      %49 = vsyncadd [#allocation6], 0
      %s51 = sshll.u32 %s5, 4
      %s52 = int_to_ptr.hbm [resolvable:$true] %s51
      %s53 = sshll.u32 [#allocation7], 4
      %s54 = int_to_ptr.vmem [resolvable:$true] %s53
      %56 = dma.hbm_to_vmem [thread:$0]  %s52, 16, %s54, [#allocation6]
    $region25: #{critic_forward.1} parent=1 // pred_fallthru
      _
    // Predicated region
    $region26: #{critic_forward.1} parent=1 // pred_check
      _
    $region27: #{critic_forward.1} parent=1 // pred_check_branch
      %58 = sbr.rel (0) target = $region29
    $region28: #{critic_forward.1} parent=1 // pred_region
      _
    $region29: #{critic_forward.1} parent=1 // pred_fallthru
      _
    // Predicated region
    $region30: #{critic_forward.1} parent=1 // pred_check
      _
    $region31: #{critic_forward.1} parent=1 // pred_check_branch
      %60 = sbr.rel (0) target = $region33
    $region32: #{critic_forward.1} parent=1 // pred_region
      _
    $region33: #{critic_forward.1} parent=1 // pred_fallthru
      _
    // Predicated region
    $region34: #{critic_forward.1} parent=1 // pred_check
      _
    $region35: #{critic_forward.1} parent=1 // pred_check_branch
      %62 = sbr.rel (0) target = $region37
    $region36: #{critic_forward.1} parent=1 // pred_region
      %64 = dma.done [#allocation4], 128
    $region37: #{critic_forward.1} parent=1 // pred_fallthru
      _
    // Predicated region
    $region38: #{critic_forward.1} parent=1 // pred_check
      _
    $region39: #{critic_forward.1} parent=1 // pred_check_branch
      %66 = sbr.rel (0) target = $region41
    $region40: #{critic_forward.1} parent=1 // pred_region
      %68 = dma.done [#allocation6], 512
    $region41: #{critic_forward.1} parent=1 // pred_fallthru
      _
    // Predicated region
    $region42: #{critic_forward.1} parent=1 // pred_check
      _
    $region43: #{critic_forward.1} parent=1 // pred_check_branch
      %70 = sbr.rel (0) target = $region45
    $region44: #{critic_forward.1} parent=1 // pred_region
      %72 = dma.done [#allocation6], 16
    $region45: #{critic_forward.1} parent=1 // pred_fallthru
      _
    %v73 = vld [vmem:[#allocation3] sm:$0xff]
    %v74 = vld [vmem:[%s1] sm:$0xff]
    %76 = vrot.lane.b32.xlu0 %v74, 12
    %v77 = vpop.permute.xlu0 %76
    %vm79 = vcmask 97280
    %v80 = vsel %vm79, %v73, %v77
    %v81 = vld [vmem:[%s2] sm:$0xff]
    %v82 = vld [vmem:[%s2 + $0x8] sm:$0xff]
    %v83 = vld [vmem:[%s3] sm:$0x1]
    %v85 = vperm.slane %v83, 0
    %vm87 = vcmask 130048
    %v89 = vsel %vm87, %v80, 0
    %91 = vmatpush.msra.mxu0 0.0
    %92 = vmatpush.msra.mxu0 0.0
    %93 = vmatpush.msra.mxu0 0.0
    %94 = vmatpush.msra.mxu0 0.0
    %95 = vmatpush.msra.mxu0 0.0
    %96 = vmatpush.msra.mxu0 0.0
    %97 = vmatpush.msra.mxu0 0.0
    %98 = vmatpush.msra.mxu0 0.0
    %99 = vmatpush.msra.mxu0 0.0
    %100 = vmatpush.msra.mxu0 0.0
    %101 = vmatpush.msra.mxu0 0.0
    %102 = vmatpush.msra.mxu0 0.0
    %103 = vmatpush.msra.mxu0 0.0
    %104 = vmatpush.msra.mxu0 0.0
    %105 = vmatpush.msra.mxu0 %v82
    %106 = vmatpush.msra.mxu0 %v81
    %107 = vmatmul.f32.gmra.mxu0 %v89
    %v108 = vpop.f32.mrf.mxu0
    %v109 = vadd.f32 %v85, %v108
    %110 = vdwg.mxu0
    %v111 = vmax.f32 %v109, 0.0
    %v112 = vld [vmem:[#allocation5] sm:$0xff]
    %v113 = vld [vmem:[#allocation5 + $0x8] sm:$0xff]
    %v114 = vld [vmem:[#allocation5 + $0x10] sm:$0xff]
    %v115 = vld [vmem:[#allocation5 + $0x18] sm:$0xff]
    %v116 = vld [vmem:[#allocation7] sm:$0x1]
    %v118 = vperm.slane %v116, 0
    %vm120 = vcmask 261120
    %v122 = vsel %vm120, %v111, 0
    %124 = vmatpush.msra.mxu0 0.0
    %125 = vmatpush.msra.mxu0 0.0
    %126 = vmatpush.msra.mxu0 0.0
    %127 = vmatpush.msra.mxu0 0.0
    %128 = vmatpush.msra.mxu0 0.0
    %129 = vmatpush.msra.mxu0 0.0
    %130 = vmatpush.msra.mxu0 0.0
    %131 = vmatpush.msra.mxu0 0.0
    %132 = vmatpush.msra.mxu0 0.0
    %133 = vmatpush.msra.mxu0 0.0
    %134 = vmatpush.msra.mxu0 0.0
    %135 = vmatpush.msra.mxu0 0.0
    %136 = vmatpush.msra.mxu0 %v115
    %137 = vmatpush.msra.mxu0 %v114
    %138 = vmatpush.msra.mxu0 %v113
    %139 = vmatpush.msra.mxu0 %v112
    %140 = vmatmul.f32.gmra.mxu0 %v122
    %v141 = vpop.f32.mrf.mxu0
    %v142 = vadd.f32 %v118, %v141
    %143 = vdwg.mxu0
    %v144 = vmax.f32 %v142, 0.0
    %v145 = vld [vmem:[%s6] sm:$0x1]
    %v147 = vperm.slane %v145, 0
    %v149 = vmul.f32 %v144, %v147
    %v150 = vsel %vm120, %v149, 0.0
    %151 = vadd.xlane.f32.xlu0 %v150
    %v152 = vpop.xlane.xlu0 %151
    %s153 = sld [smem:[#allocation2]]
    %v154 = vstv %s153
    %v155 = vadd.f32 %v152, %v154
    %vm156 = vcmask 7168
    %157 = vst.msk [vmem:[%s8] sm:$0xff] %vm156, %v155
    // Predicated region
    $region46: #{critic_forward.1} parent=1 // pred_check
      _
    $region47: #{critic_forward.1} parent=1 // pred_check_branch
      %159 = sbr.rel (0) target = $region49
    $region48: #{critic_forward.1} parent=1 // pred_region
      _
    $region49: #{critic_forward.1} parent=1 // pred_fallthru
      _
    // Predicated region
    $region50: #{critic_forward.1} parent=1 // pred_check
      _
    $region51: #{critic_forward.1} parent=1 // pred_check_branch
      %161 = sbr.rel (0) target = $region53
    $region52: #{critic_forward.1} parent=1 // pred_region
      _
    $region53: #{critic_forward.1} parent=1 // pred_fallthru
      _
    %162 = vsyncpa [#allocation4], 1
    %163 = vsyncpa [#allocation6], 1

</llo_original>
